<compile_context>
chip_gen: v7x
topology: tpu7x:2x2x1
jax: 0.10.0
libtpu: 0.0.40
codegen_flags: <defaults>
</compile_context>

<pallas_src>
import jax
import jax.numpy as jnp
import numpy as np
from jax.experimental import pallas as pl
from jax.experimental.pallas import tpu as pltpu


# ----------------------------------------------------------------------------
# Kernel
# ----------------------------------------------------------------------------
def _output_kernel(mean_ref, std_ref, x_ref, o_ref):
    """Post-process one (batch, row-tile) block.

    mean_ref, std_ref : [C_out] f32 in SMEM
    x_ref             : [1, C_in, tile_rows, cols] f32 in VMEM (lane dim = cols)
    o_ref             : [1, C_out, tile_rows, cols] u8 in VMEM (lane dim = cols)
    """
    c_in = x_ref.shape[1]
    c_out = o_ref.shape[1]

    if c_in == 1:
        # Single input channel broadcasts against std/mean (matches the torch
        # broadcast of x.mul(std) + the torch.cat channel replication).
        base = x_ref[0, 0]                                   # [tile_rows, cols]
        for c in range(c_out):
            scale = std_ref[c] * 255.0                       # scalar SMEM math
            o_ref[0, c] = (base * scale + mean_ref[c]).astype(jnp.uint8)
    else:
        for c in range(c_out):
            scale = std_ref[c] * 255.0                       # scalar SMEM math
            o_ref[0, c] = (x_ref[0, c] * scale + mean_ref[c]).astype(jnp.uint8)
    # NOTE: like the PyTorch module, no clamp before the uint8 cast; for
    # in-range image values this matches torch to within +/-1 (round vs trunc).


# ----------------------------------------------------------------------------
# Tiling helpers
# ----------------------------------------------------------------------------
def _cdiv(a, b):
    return -(-a // b)


def _round_up(x, m):
    return ((x + m - 1) // m) * m


def _block_vmem_bytes(c_in, c_out, tile_rows, cols):
    """Double-buffered, layout-padded VMEM footprint of one grid-step block."""
    cols_p = _round_up(cols, 128)
    in_b = c_in * _round_up(tile_rows, 8) * cols_p * 4       # f32, (8,128) tiles
    out_b = c_out * _round_up(tile_rows, 32) * cols_p        # u8, (32,128) tiles
    return 2 * (in_b + out_b)


def _vmem_budgets():
    """(block footprint budget, base vmem_limit_bytes, physical cap) per chip."""
    try:
        cap = pltpu.get_tpu_info().vmem_capacity_bytes
    except Exception:
        cap = 128 << 20
    if cap <= (64 << 20):                     # v7x-class: half the VMEM, 2.3x HBM BW
        return 28 << 20, 48 << 20, cap
    return 40 << 20, 72 << 20, cap            # v5e / v6e (128 MiB VMEM)


def _pick_cols(total, cap=2048):
    """Largest multiple-of-128 divisor of `total` that is <= cap, preferring
    factorizations that leave >= 64 rows for row tiling. None if no divisor."""
    best = None
    best_rowsy = None
    c = 128
    while c <= min(total, cap):
        if total % c == 0:
            best = c
            if total // c >= 64:
                best_rowsy = c
        c += 128
    return best_rowsy if best_rowsy is not None else best


def _pick_tile_rows(rows, cols, c_in, c_out, batch, budget):
    """Largest row-tile (multiple of 32, or full extent) fitting the budget,
    while guaranteeing >= 2 total grid steps when that is possible."""
    if rows <= 32:
        return rows
    candidates = [rows] + list(range((rows // 32) * 32, 31, -32))
    tile = None
    for t in candidates:
        if _block_vmem_bytes(c_in, c_out, t, cols) <= budget:
            tile = t
            break
    if tile is None:
        tile = 32
    # Force >= 2 grid steps (v7x has 2 TensorCores; also restores DMA overlap).
    if batch * _cdiv(rows, tile) < 2 and rows >= 64:
        tile = max(32, (rows // 2 // 32) * 32)
    return tile


# ----------------------------------------------------------------------------
# Wrapper
# ----------------------------------------------------------------------------
def output_forward(x, mean, std, permute_output=True):
    """Pallas equivalent of Output.forward.

    x: [B, C_in, H, W] float -> [B, W, H, C_out] uint8 (module semantics).
    Set permute_output=False to get the channel-major [B, C_out, H, W] u8
    directly (avoids a second full pass over the output if the consumer does
    not need the [B, W, H, C] layout on-device).
    """
    b, c_in, h, w = x.shape
    c_out = std.shape[0]
    assert c_in in (1, c_out), "input channels must be 1 or match len(std)"

    x = x.astype(jnp.float32)
    mean = mean.astype(jnp.float32)
    std = std.astype(jnp.float32)

    total = h * w
    # Lane-dense layout: keep natural [H, W] when W is already 128-aligned;
    # otherwise re-factor the (contiguous) H*W plane into (rows, cols) with
    # cols a large multiple of 128.  Fall back to natural layout (masked
    # stores, still correct) if H*W has no multiple-of-128 divisor.
    if w % 128 == 0:
        rows, cols = h, w
    else:
        cols = _pick_cols(total)
        if cols is None:
            rows, cols = h, w
        else:
            rows = total // cols
    x_r = x.reshape(b, c_in, rows, cols)      # free: row-major reshape

    budget, base_limit, cap = _vmem_budgets()
    tile_rows = _pick_tile_rows(rows, cols, c_in, c_out, b, budget)
    footprint = _block_vmem_bytes(c_in, c_out, tile_rows, cols)
    vmem_limit = int(min(cap - (4 << 20), max(base_limit, footprint + (8 << 20))))

    grid = (b, _cdiv(rows, tile_rows))

    cost = pl.CostEstimate(
        flops=2 * b * c_out * total,
        transcendentals=0,
        bytes_accessed=b * c_in * total * 4 + b * c_out * total,
    )

    out_flat = pl.pallas_call(
        _output_kernel,
        out_shape=jax.ShapeDtypeStruct((b, c_out, rows, cols), jnp.uint8),
        grid_spec=pltpu.PrefetchScalarGridSpec(
            num_scalar_prefetch=0,
            grid=grid,
            in_specs=[
                pl.BlockSpec(memory_space=pltpu.MemorySpace.SMEM),   # mean [C_out]
                pl.BlockSpec(memory_space=pltpu.MemorySpace.SMEM),   # std  [C_out]
                pl.BlockSpec((1, c_in, tile_rows, cols), lambda i, j: (i, 0, j, 0)),
            ],
            out_specs=pl.BlockSpec((1, c_out, tile_rows, cols),
                                   lambda i, j: (i, 0, j, 0)),
        ),
        compiler_params=pltpu.CompilerParams(
            dimension_semantics=("parallel", "parallel"),
            vmem_limit_bytes=vmem_limit),
        cost_estimate=cost,
    )(mean, std, x_r)

    out_nchw = out_flat.reshape(b, c_out, h, w)
    if not permute_output:
        return out_nchw
    # Module semantics: permute (0, 3, 2, 1) -> [B, W, H, C_out].  Done
    # wrapper-side on uint8 bytes so kernel stores stay lane-dense.
    return jnp.transpose(out_nchw, (0, 3, 2, 1))


# ----------------------------------------------------------------------------
# Reference + test
# ----------------------------------------------------------------------------
def _numpy_ref(x, mean, std):
    xn = np.asarray(x, dtype=np.float32)
    std_n = np.asarray(std, np.float32).reshape(1, -1, 1, 1)
    mean_n = np.asarray(mean, np.float32).reshape(1, -1, 1, 1)
    ref = (xn * np.float32(255.0)) * std_n + mean_n          # broadcasts c_in==1 too
    return np.transpose(ref, (0, 3, 2, 1)).astype(np.uint8)


if __name__ == "__main__":
    key = jax.random.PRNGKey(0)
    B, C, H, W = 2, 3, 16, 16

    # module parameters (deterministic defaults from Output.__init__)
    mean = jnp.asarray([0.485, 0.456, 0.406], dtype=jnp.float32)
    std = jnp.asarray([0.229, 0.224, 0.225], dtype=jnp.float32)

    # non-negative inputs keep the uint8 cast well-defined (as in real image use)
    k0, k1 = jax.random.split(key)
    x3 = jax.random.uniform(k0, (B, C, H, W), dtype=jnp.float32)   # RGB path
    x1 = jax.random.uniform(k1, (B, 1, H, W), dtype=jnp.float32)   # grayscale path

    for x in (x3, x1):
        out = output_forward(x, mean, std)
        out = jax.block_until_ready(out)
        ref = _numpy_ref(x, mean, std)

        assert out.shape == ref.shape == (x.shape[0], W, H, 3), out.shape
        assert out.dtype == jnp.uint8, out.dtype
        diff = np.abs(np.asarray(out).astype(np.int32) - ref.astype(np.int32))
        # +/-1 tolerance for float->u8 convert rounding (trunc vs round) differences.
        assert diff.max() <= 1, f"max diff {diff.max()}"

    print("KERNEL_OK")
</pallas_src>

<mosaic_0001>
module attributes {stable_mosaic.version = 11 : i64} {
  func.func @_output_kernel(%arg0: i32, %arg1: i32, %arg2: memref<3xf32, #tpu.memory_space<smem>>, %arg3: memref<3xf32, #tpu.memory_space<smem>>, %arg4: memref<1x3x1x256xf32, #tpu.memory_space<vmem>>, %arg5: memref<1x3x1x256xi8, #tpu.memory_space<vmem>>) attributes {dimension_semantics = [#tpu.dimension_semantics<parallel>, #tpu.dimension_semantics<parallel>], iteration_bounds = array<i64: 2, 1>, scalar_prefetch = 0 : i64, scratch_operands = 0 : i64, tpu.core_type = #tpu.core_type<tc>, window_params = [{transform_indices = @transform_0, window_bounds = array<i64: 3>}, {transform_indices = @transform_1, window_bounds = array<i64: 3>}, {transform_indices = @transform_2, window_bounds = array<i64: 1, 3, 1, 256>}, {transform_indices = @transform_3, window_bounds = array<i64: 1, 3, 1, 256>}]} {
    %c0 = arith.constant 0 : index
    %0 = memref.load %arg3[%c0] : memref<3xf32, #tpu.memory_space<smem>>
    %cst = arith.constant 2.550000e+02 : f32
    %1 = arith.mulf %0, %cst : f32
    %c0_0 = arith.constant 0 : index
    %c0_1 = arith.constant 0 : index
    %c0_2 = arith.constant 0 : index
    %c0_3 = arith.constant 0 : index
    %2 = vector.load %arg4[%c0_0, %c0_1, %c0_2, %c0_3] : memref<1x3x1x256xf32, #tpu.memory_space<vmem>>, vector<1x1x1x256xf32>
    %3 = vector.shape_cast %2 : vector<1x1x1x256xf32> to vector<1x256xf32>
    %4 = vector.broadcast %1 : f32 to vector<1x256xf32>
    %5 = arith.mulf %3, %4 : vector<1x256xf32>
    %c0_4 = arith.constant 0 : index
    %6 = memref.load %arg2[%c0_4] : memref<3xf32, #tpu.memory_space<smem>>
    %7 = vector.broadcast %6 : f32 to vector<1x256xf32>
    %8 = arith.addf %5, %7 : vector<1x256xf32>
    %9 = arith.fptoui %8 : vector<1x256xf32> to vector<1x256xi8>
    %c0_5 = arith.constant 0 : index
    %c0_6 = arith.constant 0 : index
    %c0_7 = arith.constant 0 : index
    %c0_8 = arith.constant 0 : index
    %10 = vector.load %arg5[%c0_5, %c0_6, %c0_7, %c0_8] : memref<1x3x1x256xi8, #tpu.memory_space<vmem>>, vector<1x1x1x256xi8>
    %11 = vector.shape_cast %10 : vector<1x1x1x256xi8> to vector<1x256xi8>
    %12 = vector.shape_cast %9 : vector<1x256xi8> to vector<1x1x1x256xi8>
    tpu.vector_store %arg5[%c0_5, %c0_6, %c0_7, %c0_8], %12 {strides = array<i32>} : memref<1x3x1x256xi8, #tpu.memory_space<vmem>>, vector<1x1x1x256xi8>,
    %c1 = arith.constant 1 : index
    %13 = memref.load %arg3[%c1] : memref<3xf32, #tpu.memory_space<smem>>
    %cst_9 = arith.constant 2.550000e+02 : f32
    %14 = arith.mulf %13, %cst_9 : f32
    %c0_10 = arith.constant 0 : index
    %c1_11 = arith.constant 1 : index
    %c0_12 = arith.constant 0 : index
    %c0_13 = arith.constant 0 : index
    %15 = vector.load %arg4[%c0_10, %c1_11, %c0_12, %c0_13] : memref<1x3x1x256xf32, #tpu.memory_space<vmem>>, vector<1x1x1x256xf32>
    %16 = vector.shape_cast %15 : vector<1x1x1x256xf32> to vector<1x256xf32>
    %17 = vector.broadcast %14 : f32 to vector<1x256xf32>
    %18 = arith.mulf %16, %17 : vector<1x256xf32>
    %c1_14 = arith.constant 1 : index
    %19 = memref.load %arg2[%c1_14] : memref<3xf32, #tpu.memory_space<smem>>
    %20 = vector.broadcast %19 : f32 to vector<1x256xf32>
    %21 = arith.addf %18, %20 : vector<1x256xf32>
    %22 = arith.fptoui %21 : vector<1x256xf32> to vector<1x256xi8>
    %c0_15 = arith.constant 0 : index
    %c1_16 = arith.constant 1 : index
    %c0_17 = arith.constant 0 : index
    %c0_18 = arith.constant 0 : index
    %23 = vector.load %arg5[%c0_15, %c1_16, %c0_17, %c0_18] : memref<1x3x1x256xi8, #tpu.memory_space<vmem>>, vector<1x1x1x256xi8>
    %24 = vector.shape_cast %23 : vector<1x1x1x256xi8> to vector<1x256xi8>
    %25 = vector.shape_cast %22 : vector<1x256xi8> to vector<1x1x1x256xi8>
    tpu.vector_store %arg5[%c0_15, %c1_16, %c0_17, %c0_18], %25 {strides = array<i32>} : memref<1x3x1x256xi8, #tpu.memory_space<vmem>>, vector<1x1x1x256xi8>,
    %c2 = arith.constant 2 : index
    %26 = memref.load %arg3[%c2] : memref<3xf32, #tpu.memory_space<smem>>
    %cst_19 = arith.constant 2.550000e+02 : f32
    %27 = arith.mulf %26, %cst_19 : f32
    %c0_20 = arith.constant 0 : index
    %c2_21 = arith.constant 2 : index
    %c0_22 = arith.constant 0 : index
    %c0_23 = arith.constant 0 : index
    %28 = vector.load %arg4[%c0_20, %c2_21, %c0_22, %c0_23] : memref<1x3x1x256xf32, #tpu.memory_space<vmem>>, vector<1x1x1x256xf32>
    %29 = vector.shape_cast %28 : vector<1x1x1x256xf32> to vector<1x256xf32>
    %30 = vector.broadcast %27 : f32 to vector<1x256xf32>
    %31 = arith.mulf %29, %30 : vector<1x256xf32>
    %c2_24 = arith.constant 2 : index
    %32 = memref.load %arg2[%c2_24] : memref<3xf32, #tpu.memory_space<smem>>
    %33 = vector.broadcast %32 : f32 to vector<1x256xf32>
    %34 = arith.addf %31, %33 : vector<1x256xf32>
    %35 = arith.fptoui %34 : vector<1x256xf32> to vector<1x256xi8>
    %c0_25 = arith.constant 0 : index
    %c2_26 = arith.constant 2 : index
    %c0_27 = arith.constant 0 : index
    %c0_28 = arith.constant 0 : index
    %36 = vector.load %arg5[%c0_25, %c2_26, %c0_27, %c0_28] : memref<1x3x1x256xi8, #tpu.memory_space<vmem>>, vector<1x1x1x256xi8>
    %37 = vector.shape_cast %36 : vector<1x1x1x256xi8> to vector<1x256xi8>
    %38 = vector.shape_cast %35 : vector<1x256xi8> to vector<1x1x1x256xi8>
    tpu.vector_store %arg5[%c0_25, %c2_26, %c0_27, %c0_28], %38 {strides = array<i32>} : memref<1x3x1x256xi8, #tpu.memory_space<vmem>>, vector<1x1x1x256xi8>,
    return
  }
  func.func @transform_0(%arg0: i32, %arg1: i32) -> i32 {
    %c0_i32 = arith.constant 0 : i32
    %c0_i32_0 = arith.constant 0 : i32
    return %c0_i32 : i32
  }
  func.func @transform_1(%arg0: i32, %arg1: i32) -> i32 {
    %c0_i32 = arith.constant 0 : i32
    %c0_i32_0 = arith.constant 0 : i32
    return %c0_i32 : i32
  }
  func.func @transform_2(%arg0: i32, %arg1: i32) -> (i32, i32, i32, i32) {
    %c0_i32 = arith.constant 0 : i32
    %c0_i32_0 = arith.constant 0 : i32
    %c0_i32_1 = arith.constant 0 : i32
    return %arg0, %c0_i32, %arg1, %c0_i32_0 : i32, i32, i32, i32
  }
  func.func @transform_3(%arg0: i32, %arg1: i32) -> (i32, i32, i32, i32) {
    %c0_i32 = arith.constant 0 : i32
    %c0_i32_0 = arith.constant 0 : i32
    %c0_i32_1 = arith.constant 0 : i32
    return %arg0, %c0_i32, %arg1, %c0_i32_0 : i32, i32, i32, i32
  }
}

</mosaic_0001>

<llo_original>
// kernel: tpu_custom_call.1
$region0: #{tpu_custom_call.1}
  #allocation0 [shape = 'u32[]', space=smem, size = 0x4, offset = 0x4, fixed_abs, tag = 'smem constant byte address 0x4 - core index']
  #allocation1 [shape = 'u32[144,128]{1,0:T(1,128)}', space=vmem, size = 0x12000, scoped, tag = 'internal scratch']
  %s0 = inlined_call_operand.hbm [shape: f32[3], index: 0, kind: input, shape index: {}]
  %s1 = inlined_call_operand.hbm [shape: f32[3], index: 1, kind: input, shape index: {}]
  %s2 = inlined_call_operand.hbm [shape: f32[2,3,1,256], index: 2, kind: input, shape index: {}]
  %s3 = inlined_call_operand.hbm [shape: u8[2,3,1,256], index: 3, kind: output, shape index: {}]
  %s4 = sld [smem:[#allocation0]]
  $region57: #{tpu_custom_call.1} parent=0
    _
  %s6 = ssub.s32 1, %s4
  %s7 = scalar_select 0, %s6, %s4
  $region1: #{tpu_custom_call.1} parent=0
    #allocation2 [shape = 'u8[512]{0}', space=smem, size = 0x200, scoped, tag = 'input window, operand 0, single buffered']
    #allocation3 [shape = 's32[2]{0}', space=sflag, size = 0x8, scoped, tag = 'scoped memory for tpu_custom_call.1']
    #allocation4 [shape = 's32[2]{0}', space=sflag, size = 0x8, scoped, tag = 'scoped memory for tpu_custom_call.1']
    #allocation5 [shape = 's32[2]{0}', space=sflag, size = 0x8, scoped, tag = 'scoped memory for tpu_custom_call.1']
    #allocation6 [shape = 'u8[512]{0}', space=smem, size = 0x200, scoped, tag = 'input window, operand 1, single buffered']
    #allocation7 [shape = 's32[1]{0}', space=sflag, size = 0x4, scoped, tag = 'scoped memory for tpu_custom_call.1']
    #allocation8 [shape = 'u8[6144]{0}', space=vmem, size = 0x1800, scoped, tag = 'input window, operand 2']
    #allocation9 [shape = 'u8[6144]{0}', space=vmem, size = 0x1800, scoped, tag = 'output window, operand 0']
    %8 = vsyncpa [#allocation5], 0
    %9 = vsyncpa [#allocation7], 0
    %10 = vsyncpa [#allocation3], 0
    %s11 = scalar_lea.sflag [#allocation3], 1
    %12 = vsyncpa %s11, 0
    %13 = vsyncpa [#allocation4], 0
    %s14 = scalar_lea.sflag [#allocation4], 1
    %15 = vsyncpa %s14, 0
    loop: start=0, step=1, limit=4
    $region2: #{tpu_custom_call.1} parent=1 // loop_pre_header
      _
    $region3: #{tpu_custom_call.1} parent=1 // loop_header
      %s17 = sphi 0, %s21
      %p18 = scmp.ge.s32.totalorder %s17, 4
      %s24 = sphi 0, %s36
      %s25 = sphi 0, %s32
      %s26 = sphi 0, %s24
      %s27 = sphi 0, %s25
      %s28 = sphi 0, %s26
      %s29 = sphi 0, %s27
      %s37 = sphi 0, %s37
      %s39 = sphi 0, %s37
      %s40 = sphi 0, %s39
      %s54 = sphi 0, %s40
      %s58 = sphi 0, %s58
      %s60 = sphi 0, %s58
      %s61 = sphi 0, %s60
      %s75 = sphi 0, %s61
      %s83 = sphi 0, %s85
      %s86 = sphi 0, %s83
      %s87 = sphi 0, %s86
      %s103 = sphi 0, %s87
      %s111 = sphi 0, %s113
      %s114 = sphi 0, %s111
      %s115 = sphi 0, %s114
      %s131 = sphi 0, %s115
    $region4: #{tpu_custom_call.1} parent=1 // loop_header_branch
      %20 = sbr.rel (%p18) target = $region8
    $region5: #{tpu_custom_call.1} parent=1 // loop_body
      %s22 = ssub.s32 %s17, 1
      %s23 = ssub.s32 %s17, 2
      %s30 = sadd.s32 1, %s25
      %p31 = scmp.ge.s32.totalorder %s30, 1
      %s32 = scalar_select %p31, 0, %s30
      %s33 = sadd.s32 1, %s24
      %s34 = scalar_select %p31, %s33, %s24
      %p35 = scmp.ge.s32.totalorder %s34, 2
      %s36 = scalar_select %p35, 0, %s34
      %s38 = sadd.s32 %s37, 1
      %p41 = scmp.eq.s32.totalorder %s17, 1
      %p42 = scmp.ne.s32.totalorder %s37, %s39
      %p43 = scmp.eq.s32.totalorder %s17, 0
      %p44 = por %p42, %p43
      %p45 = scmp.ne.s32.totalorder %s37, %s39
      %p46 = scmp.eq.s32.totalorder %s22, 1
      %p47 = por %p45, %p46
      %p48 = scmp.ne.s32.totalorder %s39, %s40
      %p49 = scmp.eq.s32.totalorder %s22, 0
      %p50 = por %p48, %p49
      %p51 = scmp.ne.s32.totalorder %s39, %s40
      %p52 = scmp.eq.s32.totalorder %s23, 1
      %p53 = por %p51, %p52
      %p55 = scmp.ne.s32.totalorder %s40, %s54
      %p56 = scmp.eq.s32.totalorder %s23, 0
      %p57 = por %p55, %p56
      %s59 = sadd.s32 %s58, 1
      %p62 = scmp.eq.s32.totalorder %s17, 1
      %p63 = scmp.ne.s32.totalorder %s58, %s60
      %p64 = scmp.eq.s32.totalorder %s17, 0
      %p65 = por %p63, %p64
      %p66 = scmp.ne.s32.totalorder %s58, %s60
      %p67 = scmp.eq.s32.totalorder %s22, 1
      %p68 = por %p66, %p67
      %p69 = scmp.ne.s32.totalorder %s60, %s61
      %p70 = scmp.eq.s32.totalorder %s22, 0
      %p71 = por %p69, %p70
      %p72 = scmp.ne.s32.totalorder %s60, %s61
      %p73 = scmp.eq.s32.totalorder %s23, 1
      %p74 = por %p72, %p73
      %p76 = scmp.ne.s32.totalorder %s61, %s75
      %p77 = scmp.eq.s32.totalorder %s23, 0
      %p78 = por %p76, %p77
      %s79 = ssub.s32 %s24, %s36
      %s80 = ssub.s32 %s25, %s32
      %s81 = sor.u32 %s79, %s80
      %p82 = scmp.eq.s32.totalorder %s81, 0
      %s84 = sadd.s32 %s83, 1
      %s85 = scalar_select %p82, %s83, %s84
      %p88 = pneg %p82
      %p89 = scmp.eq.s32.totalorder %s17, 1
      %p90 = por %p88, %p89
      %p91 = scmp.ne.s32.totalorder %s83, %s86
      %p92 = scmp.eq.s32.totalorder %s17, 0
      %p93 = por %p91, %p92
      %p94 = scmp.ne.s32.totalorder %s83, %s86
      %p95 = scmp.eq.s32.totalorder %s22, 1
      %p96 = por %p94, %p95
      %p97 = scmp.ne.s32.totalorder %s86, %s87
      %p98 = scmp.eq.s32.totalorder %s22, 0
      %p99 = por %p97, %p98
      %p100 = scmp.ne.s32.totalorder %s86, %s87
      %p101 = scmp.eq.s32.totalorder %s23, 1
      %p102 = por %p100, %p101
      %p104 = scmp.ne.s32.totalorder %s87, %s103
      %p105 = scmp.eq.s32.totalorder %s23, 0
      %p106 = por %p104, %p105
      %s107 = ssub.s32 %s24, %s36
      %s108 = ssub.s32 %s25, %s32
      %s109 = sor.u32 %s107, %s108
      %p110 = scmp.eq.s32.totalorder %s109, 0
      %s112 = sadd.s32 %s111, 1
      %s113 = scalar_select %p110, %s111, %s112
      %p116 = pneg %p110
      %p117 = scmp.eq.s32.totalorder %s17, 1
      %p118 = por %p116, %p117
      %p119 = scmp.ne.s32.totalorder %s111, %s114
      %p120 = scmp.eq.s32.totalorder %s17, 0
      %p121 = por %p119, %p120
      %p122 = scmp.ne.s32.totalorder %s111, %s114
      %p123 = scmp.eq.s32.totalorder %s22, 1
      %p124 = por %p122, %p123
      %p125 = scmp.ne.s32.totalorder %s114, %s115
      %p126 = scmp.eq.s32.totalorder %s22, 0
      %p127 = por %p125, %p126
      %p128 = scmp.ne.s32.totalorder %s114, %s115
      %p129 = scmp.eq.s32.totalorder %s23, 1
      %p130 = por %p128, %p129
      %p132 = scmp.ne.s32.totalorder %s115, %s131
      %p133 = scmp.eq.s32.totalorder %s23, 0
      %p134 = por %p132, %p133
      %p135 = scmp.le.s32.totalorder 1, %s17
      %p136 = scmp.lt.s32.totalorder %s17, 3
      %p137 = pnand %p135, %p136
      %p138 = pneg %p137
      // Predicated region
      $region9: #{tpu_custom_call.1} parent=5 // pred_check
        _
      $region10: #{tpu_custom_call.1} parent=5 // pred_check_branch
        %140 = sbr.rel (%p137) target = $region12
      $region11: #{tpu_custom_call.1} parent=5 // pred_region
        %s141 = ssub.s32 %s17, 1
        // Predicated region
        $region13: #{tpu_custom_call.1} parent=11 // pred_check
          %p142 = pneg %p50
        $region14: #{tpu_custom_call.1} parent=11 // pred_check_branch
          %144 = sbr.rel (%p142) target = $region16
        $region15: #{tpu_custom_call.1} parent=11 // pred_region
          %s146 = ssub.s32 16, 16
          %147 = vsyncadd [#allocation5], %s146
          %150 = dma.hbm_to_smem %s0, 16, [#allocation2], [#allocation5]
        $region16: #{tpu_custom_call.1} parent=11 // pred_fallthru
          _
        // Predicated region
        $region17: #{tpu_custom_call.1} parent=11 // pred_check
          %p151 = pneg %p71
        $region18: #{tpu_custom_call.1} parent=11 // pred_check_branch
          %153 = sbr.rel (%p151) target = $region20
        $region19: #{tpu_custom_call.1} parent=11 // pred_region
          %s155 = ssub.s32 16, 16
          %156 = vsyncadd [#allocation7], %s155
          %159 = dma.hbm_to_smem %s1, 16, [#allocation6], [#allocation7]
        $region20: #{tpu_custom_call.1} parent=11 // pred_fallthru
          _
      $region12: #{tpu_custom_call.1} parent=5 // pred_fallthru
        _
      %p160 = scmp.lt.s32.totalorder %s17, 2
      // Predicated region
      $region21: #{tpu_custom_call.1} parent=5 // pred_check
        %p161 = pneg %p160
      $region22: #{tpu_custom_call.1} parent=5 // pred_check_branch
        %163 = sbr.rel (%p161) target = $region24
      $region23: #{tpu_custom_call.1} parent=5 // pred_region
        // Predicated region
        $region25: #{tpu_custom_call.1} parent=23 // pred_check
          %p164 = pneg %p93
        $region26: #{tpu_custom_call.1} parent=23 // pred_check_branch
          %166 = sbr.rel (%p164) target = $region28
        $region27: #{tpu_custom_call.1} parent=23 // pred_region
          %s167 = sand.u32 %s83, 1
          %s168 = scalar_lea.sflag [#allocation3], %s167
          %s169 = sand.u32 %s83, 1
          %s170 = smul.addr %s169, 6
          %s171 = scalar_lea.vmem [#allocation8], %s170
          %s173 = ssub.s32 96, 96
          %174 = vsyncadd %s168, %s173
          %s175 = smul.addr %s25, 2
          %s176 = smul.addr %s24, 6
          %s177 = sadd.s32 %s175, %s176
          %s178 = smul.addr %s177, 16
          %s179 = scalar_lea.hbm %s2, %s178
          %s180 = sshll.u32 %s171, 4
          %s181 = int_to_ptr.vmem [resolvable:$true] %s180
          %186 = dma.hbm_to_vmem [thread:$0]  %s179, 96, %s181, %s168, 32, 32, 2
        $region28: #{tpu_custom_call.1} parent=23 // pred_fallthru
          _
      $region24: #{tpu_custom_call.1} parent=5 // pred_fallthru
        _
      %p187 = scmp.le.s32.totalorder 1, %s17
      %p188 = scmp.lt.s32.totalorder %s17, 3
      %p189 = pnand %p187, %p188
      %p190 = pneg %p189
      // Predicated region
      $region29: #{tpu_custom_call.1} parent=5 // pred_check
        _
      $region30: #{tpu_custom_call.1} parent=5 // pred_check_branch
        %192 = sbr.rel (%p189) target = $region32
      $region31: #{tpu_custom_call.1} parent=5 // pred_region
        %s193 = ssub.s32 %s17, 1
        // Predicated region
        $region33: #{tpu_custom_call.1} parent=31 // pred_check
          %p194 = pneg %p50
        $region34: #{tpu_custom_call.1} parent=31 // pred_check_branch
          %196 = sbr.rel (%p194) target = $region36
        $region35: #{tpu_custom_call.1} parent=31 // pred_region
          %197 = dma.done [#allocation5], 16
        $region36: #{tpu_custom_call.1} parent=31 // pred_fallthru
          _
        // Predicated region
        $region37: #{tpu_custom_call.1} parent=31 // pred_check
          %p198 = pneg %p71
        $region38: #{tpu_custom_call.1} parent=31 // pred_check_branch
          %200 = sbr.rel (%p198) target = $region40
        $region39: #{tpu_custom_call.1} parent=31 // pred_region
          %201 = dma.done [#allocation7], 16
        $region40: #{tpu_custom_call.1} parent=31 // pred_fallthru
          _
        %s202 = sand.u32 %s86, 1
        %s203 = scalar_lea.sflag [#allocation3], %s202
        %s204 = sand.u32 %s86, 1
        %s205 = smul.addr %s204, 6
        %s206 = scalar_lea.vmem [#allocation8], %s205
        // Predicated region
        $region41: #{tpu_custom_call.1} parent=31 // pred_check
          %p207 = pneg %p99
        $region42: #{tpu_custom_call.1} parent=31 // pred_check_branch
          %209 = sbr.rel (%p207) target = $region44
        $region43: #{tpu_custom_call.1} parent=31 // pred_region
          %210 = dma.done %s203, 96
        $region44: #{tpu_custom_call.1} parent=31 // pred_fallthru
          _
        %211 = sfence
        %p212 = pneg %p50
        %p213 = pneg %p47
        %p214 = pneg %p71
        %p215 = pneg %p68
        %s216 = sand.u32 %s86, 1
        %s217 = scalar_lea.sflag [#allocation3], %s216
        %s218 = sand.u32 %s86, 1
        %s219 = smul.addr %s218, 6
        %s220 = scalar_lea.vmem [#allocation8], %s219
        %p221 = pneg %p99
        %p222 = pneg %p96
        %p223 = pneg %p127
        %p224 = pneg %p124
        %s225 = sand.u32 %s114, 1
        %s226 = scalar_lea.sflag [#allocation4], %s225
        %s227 = sand.u32 %s114, 1
        %s228 = smul.addr %s227, 6
        %s229 = scalar_lea.vmem [#allocation9], %s228
        %s230 = sld [smem:[#allocation6]]
        %s231 = smul.f32 %s230, 255.0
        %v232 = vld [vmem:[%s206] sm:$0x3]
        %v233 = vstv %s231
        %v234 = vmul.f32 %v232, %v233
        %s235 = sld [smem:[#allocation2]]
        %v236 = vstv %s235
        %v237 = vadd.f32 %v234, %v236
        %v239 = vlaneseq
        %v240 = vshrl.u32 %v239, 7
        %v241 = vsub.s32 0, %v240
        %v242 = vrot.slane %v237, %v241
        %v243 = vlaneseq
        %v244 = vshrl.u32 %v243, 7
        %v245 = vsub.s32 1, %v244
        %v246 = vrot.slane %v237, %v245
        %v249 = vtrunc.f32 %v242
        %v250 = vtrunc.f32 %v246
        %v251 = vpack.c.f32.eXmY %v249, %v249, 56
        %v255 = vpack.c.b8 %v251, %v251
        %v257 = vpack.c.f32.eXmY %v250, %v250, 56
        %v261 = vpack.c.b8 %v257, %v257
        %v263 = vcombine.low %v255, %v261
        %v265 = vunpack.c.l.s4 1966171168
        %v266 = vunpack.c.0.s8 %v265
        %v267 = vlaneseq
        %v268 = vshrl.u32 %v267, 7
        %v269 = vsub.s32 %v266, %v268
        %v270 = vrot.slane %v263, %v269
        %v272 = vunpack.c.l.s4 1966171168
        %v273 = vunpack.c.0.s8 %v272
        %v274 = vlaneseq
        %v275 = vshrl.u32 %v274, 7
        %v276 = vsub.s32 %v273, %v275
        %v277 = vrot.slane %v270, %v276
        %vm278 = vcmask 1040384
        %vm279 = vsmask.f32 0
        %vm280 = vmand %vm278, %vm279
        %vm281 = vcmask 1041409
        %vm282 = vsmask.f32 1024
        %vm283 = vmand %vm281, %vm282
        %vm284 = vmor %vm283, %vm280
        %v285 = vld [vmem:[%s229] sm:$0x3]
        %v286 = vsel %vm284, %v277, %v285
        %287 = vst [vmem:[%s229] sm:$0x3] %v286
        %s288 = sld [smem:[#allocation6 + $0x1]]
        %s289 = smul.f32 %s288, 255.0
        %s290 = scalar_lea.vmem %s206, 2 [#allocation8]
        %v291 = vld [vmem:[%s290] sm:$0x3]
        %v292 = vstv %s289
        %v293 = vmul.f32 %v291, %v292
        %s294 = sld [smem:[#allocation2 + $0x1]]
        %v295 = vstv %s294
        %v296 = vadd.f32 %v293, %v295
        %v298 = vlaneseq
        %v299 = vshrl.u32 %v298, 7
        %v300 = vsub.s32 0, %v299
        %v301 = vrot.slane %v296, %v300
        %v302 = vlaneseq
        %v303 = vshrl.u32 %v302, 7
        %v304 = vsub.s32 1, %v303
        %v305 = vrot.slane %v296, %v304
        %v308 = vtrunc.f32 %v301
        %v309 = vtrunc.f32 %v305
        %v310 = vpack.c.f32.eXmY %v308, %v308, 56
        %v314 = vpack.c.b8 %v310, %v310
        %v316 = vpack.c.f32.eXmY %v309, %v309, 56
        %v320 = vpack.c.b8 %v316, %v316
        %v322 = vcombine.low %v314, %v320
        %v324 = vunpack.c.l.s4 1966171168
        %v325 = vunpack.c.0.s8 %v324
        %v326 = vlaneseq
        %v327 = vshrl.u32 %v326, 7
        %v328 = vsub.s32 %v325, %v327
        %v329 = vrot.slane %v322, %v328
        %v331 = vunpack.c.l.s4 1966171168
        %v332 = vunpack.c.0.s8 %v331
        %v333 = vlaneseq
        %v334 = vshrl.u32 %v333, 7
        %v335 = vsub.s32 %v332, %v334
        %v336 = vrot.slane %v329, %v335
        %s337 = scalar_lea.vmem %s229, 2 [#allocation9]
        %v338 = vld [vmem:[%s337] sm:$0x3]
        %v339 = vsel %vm284, %v336, %v338
        %340 = vst [vmem:[%s337] sm:$0x3] %v339
        %s341 = sld [smem:[#allocation6 + $0x2]]
        %s342 = smul.f32 %s341, 255.0
        %s343 = scalar_lea.vmem %s206, 4 [#allocation8]
        %v344 = vld [vmem:[%s343] sm:$0x3]
        %v345 = vstv %s342
        %v346 = vmul.f32 %v344, %v345
        %s347 = sld [smem:[#allocation2 + $0x2]]
        %v348 = vstv %s347
        %v349 = vadd.f32 %v346, %v348
        %v351 = vlaneseq
        %v352 = vshrl.u32 %v351, 7
        %v353 = vsub.s32 0, %v352
        %v354 = vrot.slane %v349, %v353
        %v355 = vlaneseq
        %v356 = vshrl.u32 %v355, 7
        %v357 = vsub.s32 1, %v356
        %v358 = vrot.slane %v349, %v357
        %v361 = vtrunc.f32 %v354
        %v362 = vtrunc.f32 %v358
        %v363 = vpack.c.f32.eXmY %v361, %v361, 56
        %v367 = vpack.c.b8 %v363, %v363
        %v369 = vpack.c.f32.eXmY %v362, %v362, 56
        %v373 = vpack.c.b8 %v369, %v369
        %v375 = vcombine.low %v367, %v373
        %v377 = vunpack.c.l.s4 1966171168
        %v378 = vunpack.c.0.s8 %v377
        %v379 = vlaneseq
        %v380 = vshrl.u32 %v379, 7
        %v381 = vsub.s32 %v378, %v380
        %v382 = vrot.slane %v375, %v381
        %v384 = vunpack.c.l.s4 1966171168
        %v385 = vunpack.c.0.s8 %v384
        %v386 = vlaneseq
        %v387 = vshrl.u32 %v386, 7
        %v388 = vsub.s32 %v385, %v387
        %v389 = vrot.slane %v382, %v388
        %s390 = scalar_lea.vmem %s229, 4 [#allocation9]
        %v391 = vld [vmem:[%s390] sm:$0x3]
        %v392 = vsel %vm284, %v389, %v391
        %393 = vst [vmem:[%s390] sm:$0x3] %v392
        %s394 = sand.u32 %s114, 1
        %s395 = scalar_lea.sflag [#allocation4], %s394
        %s396 = sand.u32 %s114, 1
        %s397 = smul.addr %s396, 6
        %s398 = scalar_lea.vmem [#allocation9], %s397
        // Predicated region
        $region45: #{tpu_custom_call.1} parent=31 // pred_check
          %p399 = pneg %p124
        $region46: #{tpu_custom_call.1} parent=31 // pred_check_branch
          %401 = sbr.rel (%p399) target = $region48
        $region47: #{tpu_custom_call.1} parent=31 // pred_region
          %s403 = ssub.s32 96, 96
          %404 = vsyncadd %s395, %s403
          %s405 = smul.addr %s27, 2
          %s406 = smul.addr %s26, 6
          %s407 = sadd.s32 %s405, %s406
          %s408 = smul.addr %s407, 16
          %s409 = scalar_lea.hbm %s3, %s408
          %s410 = sshll.u32 %s398, 4
          %s411 = int_to_ptr.vmem [resolvable:$true] %s410
          %416 = dma.vmem_to_hbm [thread:$0]  %s411, 96, %s409, %s395, 32, 32, 2
        $region48: #{tpu_custom_call.1} parent=31 // pred_fallthru
          _
      $region32: #{tpu_custom_call.1} parent=5 // pred_fallthru
        _
      %p417 = scmp.le.s32.totalorder 2, %s17
      // Predicated region
      $region49: #{tpu_custom_call.1} parent=5 // pred_check
        %p418 = pneg %p417
      $region50: #{tpu_custom_call.1} parent=5 // pred_check_branch
        %420 = sbr.rel (%p418) target = $region52
      $region51: #{tpu_custom_call.1} parent=5 // pred_region
        %s421 = ssub.s32 %s17, 2
        // Predicated region
        $region53: #{tpu_custom_call.1} parent=51 // pred_check
          %p422 = pneg %p130
        $region54: #{tpu_custom_call.1} parent=51 // pred_check_branch
          %424 = sbr.rel (%p422) target = $region56
        $region55: #{tpu_custom_call.1} parent=51 // pred_region
          %s425 = sand.u32 %s115, 1
          %s426 = scalar_lea.sflag [#allocation4], %s425
          %s427 = sand.u32 %s115, 1
          %s428 = smul.addr %s427, 6
          %s429 = scalar_lea.vmem [#allocation9], %s428
          %430 = dma.done %s426, 96
        $region56: #{tpu_custom_call.1} parent=51 // pred_fallthru
          _
      $region52: #{tpu_custom_call.1} parent=5 // pred_fallthru
        _
    $region6: #{tpu_custom_call.1} parent=1 // loop_footer
      %s21 = sadd.s32 1, %s17
    $region7: #{tpu_custom_call.1} parent=1 // loop_footer_branch
      %16 = sbr.rel target = $region3
    $region8: #{tpu_custom_call.1} parent=1 // loop_exit
      _
    %431 = vsyncpa [#allocation3], 1
    %s432 = scalar_lea.sflag [#allocation3], 1
    %433 = vsyncpa %s432, 1
    %434 = vsyncpa [#allocation4], 1
    %s435 = scalar_lea.sflag [#allocation4], 1
    %436 = vsyncpa %s435, 1
    %437 = vsyncpa [#allocation5], 1
    %s438 = scalar_lea.sflag [#allocation5], 1
    %439 = vsyncpa %s438, 1
    %440 = vsyncpa [#allocation7], 1

</llo_original>
